<compile_context>
chip_gen: v5e
topology: v5e:2x2
jax: 0.10.0
libtpu: 0.0.40
codegen_flags: <defaults>
</compile_context>

<pallas_src>
import jax
import jax.numpy as jnp
from jax.experimental import pallas as pl
from jax.experimental.pallas import tpu as pltpu


def _round_up(x, m):
    return (x + m - 1) // m * m


# ---------------------------------------------------------------------------
# Kernel 1: per-node projections (small lane-padded matmuls), grid over rows.
#   s = feat @ W_self + (b_self + b_neigh)    (f32, added in the epilogue)
#   p = feat @ W_neigh                        (bf16, streamed operand of adj @ p)
# ---------------------------------------------------------------------------
def _proj_kernel(feat_ref, w_self_ref, w_neigh_ref, bias_ref, s_ref, p_ref):
    feat = feat_ref[...]
    s_ref[...] = (jnp.dot(feat, w_self_ref[...],
                          preferred_element_type=jnp.float32) + bias_ref[...])
    p_ref[...] = jnp.dot(feat, w_neigh_ref[...],
                         preferred_element_type=jnp.float32).astype(p_ref.dtype)


# ---------------------------------------------------------------------------
# Kernel 2: tiled aggregation  out[i] = s[i] + sum_k adj[i, k] @ p[k]
#   grid = (N/TM, N/TK); rows 'parallel', K 'arbitrary' (reduction).
#   adj / p tiles are bf16; accumulation is f32 in VMEM scratch.
# ---------------------------------------------------------------------------
def _agg_kernel(adj_ref, p_ref, s_ref, out_ref, acc_ref):
    k = pl.program_id(1)

    @pl.when(k == 0)
    def _():
        acc_ref[...] = jnp.zeros_like(acc_ref)

    acc_ref[...] += jnp.dot(adj_ref[...], p_ref[...],
                            preferred_element_type=jnp.float32)

    @pl.when(k == pl.num_programs(1) - 1)
    def _():
        out_ref[...] = (acc_ref[...] + s_ref[...]).astype(out_ref.dtype)


def sage_conv_sum(adj, feat, w_self, b_self, w_neigh, b_neigh, *, tm=256, tk=256):
    """SAGEConv forward, aggregator 'sum' (feat_drop=0, activation/norm=None).

    adj:  (N, N)      adj[dst, src] = e_feat of edge src->dst (0 if absent)
    feat: (N, D_in)   node features
    w_*:  (D_in, D_out) pre-transposed Linear weights, b_*: (1, D_out)
    returns (N, D_out) float32
    """
    N, d_in = feat.shape
    d_out = w_self.shape[1]
    assert adj.shape == (N, N)
    assert max(tm, tk) % min(tm, tk) == 0

    f32 = jnp.float32
    bf16 = jnp.bfloat16

    # Lane-dense / tile-aligned padding (sliced back at the end).
    d_in_p = _round_up(d_in, 128)
    d_out_p = _round_up(d_out, 128)
    n_p = _round_up(N, max(tm, tk))

    feat_p = jnp.zeros((n_p, d_in_p), f32).at[:N, :d_in].set(feat.astype(f32))
    adj_p = jnp.zeros((n_p, n_p), bf16).at[:N, :N].set(adj.astype(bf16))
    w_self_p = jnp.zeros((d_in_p, d_out_p), f32).at[:d_in, :d_out].set(w_self.astype(f32))
    w_neigh_p = jnp.zeros((d_in_p, d_out_p), f32).at[:d_in, :d_out].set(w_neigh.astype(f32))
    bias_p = jnp.zeros((1, d_out_p), f32).at[:, :d_out].set((b_self + b_neigh).astype(f32))

    # ---- projections: s = feat @ W_self + bias (f32), p = feat @ W_neigh (bf16)
    s, p = pl.pallas_call(
        _proj_kernel,
        out_shape=(jax.ShapeDtypeStruct((n_p, d_out_p), f32),
                   jax.ShapeDtypeStruct((n_p, d_out_p), bf16)),
        grid_spec=pltpu.PrefetchScalarGridSpec(
            num_scalar_prefetch=0,
            grid=(n_p // tm,),
            in_specs=[
                pl.BlockSpec((tm, d_in_p), lambda i: (i, 0)),
                pl.BlockSpec((d_in_p, d_out_p), lambda i: (0, 0)),   # resident
                pl.BlockSpec((d_in_p, d_out_p), lambda i: (0, 0)),   # resident
                pl.BlockSpec((1, d_out_p), lambda i: (0, 0)),        # resident
            ],
            out_specs=[
                pl.BlockSpec((tm, d_out_p), lambda i: (i, 0)),
                pl.BlockSpec((tm, d_out_p), lambda i: (i, 0)),
            ],
        ),
        compiler_params=pltpu.CompilerParams(
            dimension_semantics=("parallel",),
        ),
    )(feat_p, w_self_p, w_neigh_p, bias_p)

    # ---- tiled aggregation: out = s + adj @ p
    out_p = pl.pallas_call(
        _agg_kernel,
        out_shape=jax.ShapeDtypeStruct((n_p, d_out_p), f32),
        grid_spec=pltpu.PrefetchScalarGridSpec(
            num_scalar_prefetch=0,
            grid=(n_p // tm, n_p // tk),
            in_specs=[
                pl.BlockSpec((tm, tk), lambda i, k: (i, k)),        # adj tile (bf16 stream)
                pl.BlockSpec((tk, d_out_p), lambda i, k: (k, 0)),   # p tile (bf16)
                pl.BlockSpec((tm, d_out_p), lambda i, k: (i, 0)),   # s, resident over k
            ],
            out_specs=pl.BlockSpec((tm, d_out_p), lambda i, k: (i, 0)),
            scratch_shapes=[pltpu.VMEM((tm, d_out_p), jnp.float32)],
        ),
        compiler_params=pltpu.CompilerParams(
            dimension_semantics=("parallel", "arbitrary"),
            vmem_limit_bytes=64 * 1024 * 1024,   # tiles here use only a few hundred KiB
        ),
    )(adj_p, p, s)

    return out_p[:N, :d_out]


def xavier_uniform(key, fan_in, fan_out, gain):
    bound = gain * jnp.sqrt(6.0 / (fan_in + fan_out))
    # PyTorch Linear weight is (out, in); we return the transposed (in, out).
    return jax.random.uniform(key, (fan_in, fan_out), jnp.float32, -bound, bound)


if __name__ == "__main__":
    N = 64          # number of nodes
    D_IN = 32       # in_feats
    D_OUT = 32      # out_feats

    key = jax.random.PRNGKey(0)
    k_feat, k_mask, k_e, k_ws, k_wn, k_bs, k_bn = jax.random.split(key, 7)

    # node features
    feat = jax.random.normal(k_feat, (N, D_IN), jnp.float32)

    # dense graph: adj[dst, src] = e_feat of edge src->dst (0 if absent)
    mask = (jax.random.uniform(k_mask, (N, N)) < 0.3).astype(jnp.float32)
    e_weights = jax.random.normal(k_e, (N, N), jnp.float32)
    adj = mask * e_weights

    # parameters (xavier_uniform with relu gain = sqrt(2), as in reset_parameters)
    gain = jnp.sqrt(2.0)
    w_self = xavier_uniform(k_ws, D_IN, D_OUT, gain)       # (D_in, D_out)
    w_neigh = xavier_uniform(k_wn, D_IN, D_OUT, gain)      # (D_in, D_out)
    bb = 1.0 / jnp.sqrt(D_IN)
    b_self = jax.random.uniform(k_bs, (1, D_OUT), jnp.float32, -bb, bb)
    b_neigh = jax.random.uniform(k_bn, (1, D_OUT), jnp.float32, -bb, bb)

    fn = jax.jit(sage_conv_sum)
    out = fn(adj, feat, w_self, b_self, w_neigh, b_neigh)
    out = jax.block_until_ready(out)

    # Pure-JAX f32 reference (true f32 matmuls). The kernel streams adj and the
    # projected neighbour operand in bf16 (f32 accumulation), so tolerances are
    # set at the bf16-rounding level of the O(1)-magnitude inputs.
    hp = jax.lax.Precision.HIGHEST
    ref = (jnp.dot(feat, w_self, precision=hp) + b_self
           + jnp.dot(adj, jnp.dot(feat, w_neigh, precision=hp), precision=hp)
           + b_neigh)
    assert jnp.allclose(out, ref, atol=2e-1, rtol=5e-2), "mismatch vs f32 reference"

    print("KERNEL_OK")
</pallas_src>

<mosaic_0001>
module attributes {stable_mosaic.version = 11 : i64} {
  func.func @_proj_kernel(%arg0: i32, %arg1: memref<256x128xf32, #tpu.memory_space<vmem>>, %arg2: memref<128x128xf32, #tpu.memory_space<vmem>>, %arg3: memref<128x128xf32, #tpu.memory_space<vmem>>, %arg4: memref<1x128xf32, #tpu.memory_space<vmem>>, %arg5: memref<256x128xf32, #tpu.memory_space<vmem>>, %arg6: memref<256x128xbf16, #tpu.memory_space<vmem>>) attributes {dimension_semantics = [#tpu.dimension_semantics<parallel>], iteration_bounds = array<i64: 1>, scalar_prefetch = 0 : i64, scratch_operands = 0 : i64, tpu.core_type = #tpu.core_type<tc>, window_params = [{transform_indices = @transform_0, window_bounds = array<i64: 256, 128>}, {pipeline_mode = #tpu.pipeline_mode<synchronous>, transform_indices = @transform_1, window_bounds = array<i64: 128, 128>}, {pipeline_mode = #tpu.pipeline_mode<synchronous>, transform_indices = @transform_2, window_bounds = array<i64: 128, 128>}, {pipeline_mode = #tpu.pipeline_mode<synchronous>, transform_indices = @transform_3, window_bounds = array<i64: 1, 128>}, {transform_indices = @transform_4, window_bounds = array<i64: 256, 128>}, {transform_indices = @transform_5, window_bounds = array<i64: 256, 128>}]} {
    %c0 = arith.constant 0 : index
    %c0_0 = arith.constant 0 : index
    %0 = vector.load %arg1[%c0, %c0_0] : memref<256x128xf32, #tpu.memory_space<vmem>>, vector<256x128xf32>
    %c0_1 = arith.constant 0 : index
    %c0_2 = arith.constant 0 : index
    %1 = vector.load %arg2[%c0_1, %c0_2] : memref<128x128xf32, #tpu.memory_space<vmem>>, vector<128x128xf32>
    %cst = arith.constant dense<0.000000e+00> : vector<256x128xf32>
    %2 = tpu.matmul %0, %1, %cst {dimension_numbers = #tpu.dot_dimension_numbers<[1], [0], [0], [1], [0, 0, 1, 1], [], []>} : vector<256x128xf32>, vector<128x128xf32>, vector<256x128xf32> -> vector<256x128xf32>
    %c0_3 = arith.constant 0 : index
    %c0_4 = arith.constant 0 : index
    %3 = vector.load %arg4[%c0_3, %c0_4] : memref<1x128xf32, #tpu.memory_space<vmem>>, vector<1x128xf32>
    %4 = vector.broadcast %3 : vector<1x128xf32> to vector<256x128xf32>
    %5 = arith.addf %2, %4 : vector<256x128xf32>
    %c0_5 = arith.constant 0 : index
    %c0_6 = arith.constant 0 : index
    %6 = vector.load %arg5[%c0_5, %c0_6] : memref<256x128xf32, #tpu.memory_space<vmem>>, vector<256x128xf32>
    tpu.vector_store %arg5[%c0_5, %c0_6], %5 {strides = array<i32>} : memref<256x128xf32, #tpu.memory_space<vmem>>, vector<256x128xf32>,
    %c0_7 = arith.constant 0 : index
    %c0_8 = arith.constant 0 : index
    %7 = vector.load %arg3[%c0_7, %c0_8] : memref<128x128xf32, #tpu.memory_space<vmem>>, vector<128x128xf32>
    %cst_9 = arith.constant dense<0.000000e+00> : vector<256x128xf32>
    %8 = tpu.matmul %0, %7, %cst_9 {dimension_numbers = #tpu.dot_dimension_numbers<[1], [0], [0], [1], [0, 0, 1, 1], [], []>} : vector<256x128xf32>, vector<128x128xf32>, vector<256x128xf32> -> vector<256x128xf32>
    %9 = arith.truncf %8 : vector<256x128xf32> to vector<256x128xbf16>
    %c0_10 = arith.constant 0 : index
    %c0_11 = arith.constant 0 : index
    %10 = vector.load %arg6[%c0_10, %c0_11] : memref<256x128xbf16, #tpu.memory_space<vmem>>, vector<256x128xbf16>
    tpu.vector_store %arg6[%c0_10, %c0_11], %9 {strides = array<i32>} : memref<256x128xbf16, #tpu.memory_space<vmem>>, vector<256x128xbf16>,
    return
  }
  func.func @transform_0(%arg0: i32) -> (i32, i32) {
    %c0_i32 = arith.constant 0 : i32
    %c0_i32_0 = arith.constant 0 : i32
    return %arg0, %c0_i32 : i32, i32
  }
  func.func @transform_1(%arg0: i32) -> (i32, i32) {
    %c0_i32 = arith.constant 0 : i32
    %c0_i32_0 = arith.constant 0 : i32
    %c0_i32_1 = arith.constant 0 : i32
    return %c0_i32, %c0_i32_0 : i32, i32
  }
  func.func @transform_2(%arg0: i32) -> (i32, i32) {
    %c0_i32 = arith.constant 0 : i32
    %c0_i32_0 = arith.constant 0 : i32
    %c0_i32_1 = arith.constant 0 : i32
    return %c0_i32, %c0_i32_0 : i32, i32
  }
  func.func @transform_3(%arg0: i32) -> (i32, i32) {
    %c0_i32 = arith.constant 0 : i32
    %c0_i32_0 = arith.constant 0 : i32
    %c0_i32_1 = arith.constant 0 : i32
    return %c0_i32, %c0_i32_0 : i32, i32
  }
  func.func @transform_4(%arg0: i32) -> (i32, i32) {
    %c0_i32 = arith.constant 0 : i32
    %c0_i32_0 = arith.constant 0 : i32
    return %arg0, %c0_i32 : i32, i32
  }
  func.func @transform_5(%arg0: i32) -> (i32, i32) {
    %c0_i32 = arith.constant 0 : i32
    %c0_i32_0 = arith.constant 0 : i32
    return %arg0, %c0_i32 : i32, i32
  }
}

module attributes {stable_mosaic.version = 11 : i64} {
  func.func @_agg_kernel(%arg0: i32, %arg1: i32, %arg2: memref<256x256xbf16, #tpu.memory_space<vmem>>, %arg3: memref<256x128xbf16, #tpu.memory_space<vmem>>, %arg4: memref<256x128xf32, #tpu.memory_space<vmem>>, %arg5: memref<256x128xf32, #tpu.memory_space<vmem>>, %arg6: memref<256x128xf32, #tpu.memory_space<vmem>>) attributes {dimension_semantics = [#tpu.dimension_semantics<parallel>, #tpu.dimension_semantics<arbitrary>], iteration_bounds = array<i64: 1, 1>, scalar_prefetch = 0 : i64, scratch_operands = 1 : i64, tpu.core_type = #tpu.core_type<tc>, window_params = [{transform_indices = @transform_0, window_bounds = array<i64: 256, 256>}, {transform_indices = @transform_1, window_bounds = array<i64: 256, 128>}, {transform_indices = @transform_2, window_bounds = array<i64: 256, 128>}, {transform_indices = @transform_3, window_bounds = array<i64: 256, 128>}]} {
    %c0_i32 = arith.constant 0 : i32
    %0 = arith.cmpi eq, %arg1, %c0_i32 : i32
    %1 = arith.extui %0 : i1 to i32
    %c0_i32_0 = arith.constant 0 : i32
    %2 = arith.cmpi ne, %1, %c0_i32_0 : i32
    scf.if %2 {
      %cst_10 = arith.constant 0.000000e+00 : f32
      %12 = vector.broadcast %cst_10 : f32 to vector<256x128xf32>
      %c0_11 = arith.constant 0 : index
      %c0_12 = arith.constant 0 : index
      %13 = vector.load %arg6[%c0_11, %c0_12] : memref<256x128xf32, #tpu.memory_space<vmem>>, vector<256x128xf32>
      tpu.vector_store %arg6[%c0_11, %c0_12], %12 {strides = array<i32>} : memref<256x128xf32, #tpu.memory_space<vmem>>, vector<256x128xf32>,
    } else {
    }
    %c0 = arith.constant 0 : index
    %c0_1 = arith.constant 0 : index
    %3 = vector.load %arg6[%c0, %c0_1] : memref<256x128xf32, #tpu.memory_space<vmem>>, vector<256x128xf32>
    %c0_2 = arith.constant 0 : index
    %c0_3 = arith.constant 0 : index
    %4 = vector.load %arg2[%c0_2, %c0_3] : memref<256x256xbf16, #tpu.memory_space<vmem>>, vector<256x256xbf16>
    %c0_4 = arith.constant 0 : index
    %c0_5 = arith.constant 0 : index
    %5 = vector.load %arg3[%c0_4, %c0_5] : memref<256x128xbf16, #tpu.memory_space<vmem>>, vector<256x128xbf16>
    %cst = arith.constant dense<0.000000e+00> : vector<256x128xf32>
    %6 = tpu.matmul %4, %5, %cst {dimension_numbers = #tpu.dot_dimension_numbers<[1], [0], [0], [1], [0, 0, 1, 1], [], []>} : vector<256x256xbf16>, vector<256x128xbf16>, vector<256x128xf32> -> vector<256x128xf32>
    %7 = arith.addf %3, %6 : vector<256x128xf32>
    %c0_6 = arith.constant 0 : index
    %c0_7 = arith.constant 0 : index
    %8 = vector.load %arg6[%c0_6, %c0_7] : memref<256x128xf32, #tpu.memory_space<vmem>>, vector<256x128xf32>
    tpu.vector_store %arg6[%c0_6, %c0_7], %7 {strides = array<i32>} : memref<256x128xf32, #tpu.memory_space<vmem>>, vector<256x128xf32>,
    %c0_i32_8 = arith.constant 0 : i32
    %9 = arith.cmpi eq, %arg1, %c0_i32_8 : i32
    %10 = arith.extui %9 : i1 to i32
    %c0_i32_9 = arith.constant 0 : i32
    %11 = arith.cmpi ne, %10, %c0_i32_9 : i32
    scf.if %11 {
      %c0_10 = arith.constant 0 : index
      %c0_11 = arith.constant 0 : index
      %12 = vector.load %arg6[%c0_10, %c0_11] : memref<256x128xf32, #tpu.memory_space<vmem>>, vector<256x128xf32>
      %c0_12 = arith.constant 0 : index
      %c0_13 = arith.constant 0 : index
      %13 = vector.load %arg4[%c0_12, %c0_13] : memref<256x128xf32, #tpu.memory_space<vmem>>, vector<256x128xf32>
      %14 = arith.addf %12, %13 : vector<256x128xf32>
      %c0_14 = arith.constant 0 : index
      %c0_15 = arith.constant 0 : index
      %15 = vector.load %arg5[%c0_14, %c0_15] : memref<256x128xf32, #tpu.memory_space<vmem>>, vector<256x128xf32>
      tpu.vector_store %arg5[%c0_14, %c0_15], %14 {strides = array<i32>} : memref<256x128xf32, #tpu.memory_space<vmem>>, vector<256x128xf32>,
    } else {
    }
    return
  }
  func.func @transform_0(%arg0: i32, %arg1: i32) -> (i32, i32) {
    %c0_i32 = arith.constant 0 : i32
    return %arg0, %arg1 : i32, i32
  }
  func.func @transform_1(%arg0: i32, %arg1: i32) -> (i32, i32) {
    %c0_i32 = arith.constant 0 : i32
    %c0_i32_0 = arith.constant 0 : i32
    return %arg1, %c0_i32 : i32, i32
  }
  func.func @transform_2(%arg0: i32, %arg1: i32) -> (i32, i32) {
    %c0_i32 = arith.constant 0 : i32
    %c0_i32_0 = arith.constant 0 : i32
    return %arg0, %c0_i32 : i32, i32
  }
  func.func @transform_3(%arg0: i32, %arg1: i32) -> (i32, i32) {
    %c0_i32 = arith.constant 0 : i32
    %c0_i32_0 = arith.constant 0 : i32
    return %arg0, %c0_i32 : i32, i32
  }
}

</mosaic_0001>

<llo_original>
// kernel: sage_conv_sum.2
$region0: #{sage_conv_sum.2}
  #allocation0 [shape = 'u32[]', space=smem, size = 0x4, offset = 0x4, fixed_abs, tag = 'smem constant byte address 0x4 - core index']
  #allocation1 [shape = 'u32[72,128]{1,0:T(1,128)}', space=vmem, size = 0x9000, scoped, tag = 'internal scratch']
  %s0 = inlined_call_operand.vmem [shape: f32[256,128], index: 0, kind: input, shape index: {}]
  %s1 = inlined_call_operand.vmem [shape: f32[128,128], index: 1, kind: input, shape index: {}]
  %s2 = inlined_call_operand.vmem [shape: f32[128,128], index: 2, kind: input, shape index: {}]
  %s3 = inlined_call_operand.vmem [shape: f32[1,128], index: 3, kind: input, shape index: {}]
  %s4 = inlined_call_operand.vmem [shape: f32[256,128], index: 4, kind: output, shape index: {0}]
  %s5 = inlined_call_operand.vmem [shape: bf16[256,128], index: 5, kind: output, shape index: {1}]
  %6 = xla_tuple %s4, %s5
  %s7 = sld [smem:[#allocation0]]
  $region34: #{sage_conv_sum.2} parent=0
    _
  %s9 = ssub.s32 1, %s7
  %s10 = scalar_select 0, %s9, %s7
  // Predicated region
  $region2: #{sage_conv_sum.2} parent=0 // pred_check
    _
  $region3: #{sage_conv_sum.2} parent=0 // pred_check_branch
    %12 = sbr.rel (0) target = $region5
  $region4: #{sage_conv_sum.2} parent=0 // pred_region
    _
  $region5: #{sage_conv_sum.2} parent=0 // pred_fallthru
    _
  // Predicated region
  $region6: #{sage_conv_sum.2} parent=0 // pred_check
    _
  $region7: #{sage_conv_sum.2} parent=0 // pred_check_branch
    %14 = sbr.rel (0) target = $region9
  $region8: #{sage_conv_sum.2} parent=0 // pred_region
    _
  $region9: #{sage_conv_sum.2} parent=0 // pred_fallthru
    _
  // Predicated region
  $region10: #{sage_conv_sum.2} parent=0 // pred_check
    _
  $region11: #{sage_conv_sum.2} parent=0 // pred_check_branch
    %16 = sbr.rel (0) target = $region13
  $region12: #{sage_conv_sum.2} parent=0 // pred_region
    _
  $region13: #{sage_conv_sum.2} parent=0 // pred_fallthru
    _
  // Predicated region
  $region14: #{sage_conv_sum.2} parent=0 // pred_check
    _
  $region15: #{sage_conv_sum.2} parent=0 // pred_check_branch
    %18 = sbr.rel (0) target = $region17
  $region16: #{sage_conv_sum.2} parent=0 // pred_region
    _
  $region17: #{sage_conv_sum.2} parent=0 // pred_fallthru
    _
  %v19 = vld [vmem:[%s0] sm:$0xff]
  %v20 = vld [vmem:[%s0 + $0x8] sm:$0xff]
  %v21 = vld [vmem:[%s0 + $0x10] sm:$0xff]
  %v22 = vld [vmem:[%s0 + $0x18] sm:$0xff]
  %v23 = vld [vmem:[%s0 + $0x20] sm:$0xff]
  %v24 = vld [vmem:[%s0 + $0x28] sm:$0xff]
  %v25 = vld [vmem:[%s0 + $0x30] sm:$0xff]
  %v26 = vld [vmem:[%s0 + $0x38] sm:$0xff]
  %v27 = vld [vmem:[%s0 + $0x40] sm:$0xff]
  %v28 = vld [vmem:[%s0 + $0x48] sm:$0xff]
  %v29 = vld [vmem:[%s0 + $0x50] sm:$0xff]
  %v30 = vld [vmem:[%s0 + $0x58] sm:$0xff]
  %v31 = vld [vmem:[%s0 + $0x60] sm:$0xff]
  %v32 = vld [vmem:[%s0 + $0x68] sm:$0xff]
  %v33 = vld [vmem:[%s0 + $0x70] sm:$0xff]
  %v34 = vld [vmem:[%s0 + $0x78] sm:$0xff]
  %v35 = vld [vmem:[%s0 + $0x80] sm:$0xff]
  %v36 = vld [vmem:[%s0 + $0x88] sm:$0xff]
  %v37 = vld [vmem:[%s0 + $0x90] sm:$0xff]
  %v38 = vld [vmem:[%s0 + $0x98] sm:$0xff]
  %v39 = vld [vmem:[%s0 + $0xa0] sm:$0xff]
  %v40 = vld [vmem:[%s0 + $0xa8] sm:$0xff]
  %v41 = vld [vmem:[%s0 + $0xb0] sm:$0xff]
  %v42 = vld [vmem:[%s0 + $0xb8] sm:$0xff]
  %v43 = vld [vmem:[%s0 + $0xc0] sm:$0xff]
  %v44 = vld [vmem:[%s0 + $0xc8] sm:$0xff]
  %v45 = vld [vmem:[%s0 + $0xd0] sm:$0xff]
  %v46 = vld [vmem:[%s0 + $0xd8] sm:$0xff]
  %v47 = vld [vmem:[%s0 + $0xe0] sm:$0xff]
  %v48 = vld [vmem:[%s0 + $0xe8] sm:$0xff]
  %v49 = vld [vmem:[%s0 + $0xf0] sm:$0xff]
  %v50 = vld [vmem:[%s0 + $0xf8] sm:$0xff]
  %v51 = vld [vmem:[%s1] sm:$0xff]
  %v52 = vld [vmem:[%s1 + $0x8] sm:$0xff]
  %v53 = vld [vmem:[%s1 + $0x10] sm:$0xff]
  %v54 = vld [vmem:[%s1 + $0x18] sm:$0xff]
  %v55 = vld [vmem:[%s1 + $0x20] sm:$0xff]
  %v56 = vld [vmem:[%s1 + $0x28] sm:$0xff]
  %v57 = vld [vmem:[%s1 + $0x30] sm:$0xff]
  %v58 = vld [vmem:[%s1 + $0x38] sm:$0xff]
  %v59 = vld [vmem:[%s1 + $0x40] sm:$0xff]
  %v60 = vld [vmem:[%s1 + $0x48] sm:$0xff]
  %v61 = vld [vmem:[%s1 + $0x50] sm:$0xff]
  %v62 = vld [vmem:[%s1 + $0x58] sm:$0xff]
  %v63 = vld [vmem:[%s1 + $0x60] sm:$0xff]
  %v64 = vld [vmem:[%s1 + $0x68] sm:$0xff]
  %v65 = vld [vmem:[%s1 + $0x70] sm:$0xff]
  %v66 = vld [vmem:[%s1 + $0x78] sm:$0xff]
  %v67 = vld [vmem:[%s3] sm:$0x1]
  %v69 = vperm.slane %v67, 0
  %71 = vmatpush.msra.mxu0 %v66
  %72 = vmatpush.msra.mxu0 %v65
  %73 = vmatpush.msra.mxu0 %v64
  %74 = vmatpush.msra.mxu0 %v63
  %75 = vmatpush.msra.mxu0 %v62
  %76 = vmatpush.msra.mxu0 %v61
  %77 = vmatpush.msra.mxu0 %v60
  %78 = vmatpush.msra.mxu0 %v59
  %79 = vmatpush.msra.mxu0 %v58
  %80 = vmatpush.msra.mxu0 %v57
  %81 = vmatpush.msra.mxu0 %v56
  %82 = vmatpush.msra.mxu0 %v55
  %83 = vmatpush.msra.mxu0 %v54
  %84 = vmatpush.msra.mxu0 %v53
  %85 = vmatpush.msra.mxu0 %v52
  %86 = vmatpush.msra.mxu0 %v51
  %87 = vmatmul.f32.gmra.mxu0 %v19
  %v88 = vpop.f32.mrf.mxu0
  %v89 = vadd.f32 %v69, %v88
  %90 = vmatmul.f32.gmra.mxu0 %v20
  %v91 = vpop.f32.mrf.mxu0
  %v92 = vadd.f32 %v69, %v91
  %93 = vmatmul.f32.gmra.mxu0 %v21
  %v94 = vpop.f32.mrf.mxu0
  %v95 = vadd.f32 %v69, %v94
  %96 = vmatmul.f32.gmra.mxu0 %v22
  %v97 = vpop.f32.mrf.mxu0
  %v98 = vadd.f32 %v69, %v97
  %99 = vmatmul.f32.gmra.mxu0 %v23
  %v100 = vpop.f32.mrf.mxu0
  %v101 = vadd.f32 %v69, %v100
  %102 = vmatmul.f32.gmra.mxu0 %v24
  %v103 = vpop.f32.mrf.mxu0
  %v104 = vadd.f32 %v69, %v103
  %105 = vmatmul.f32.gmra.mxu0 %v25
  %v106 = vpop.f32.mrf.mxu0
  %v107 = vadd.f32 %v69, %v106
  %108 = vmatmul.f32.gmra.mxu0 %v26
  %v109 = vpop.f32.mrf.mxu0
  %v110 = vadd.f32 %v69, %v109
  %111 = vmatmul.f32.gmra.mxu0 %v27
  %v112 = vpop.f32.mrf.mxu0
  %v113 = vadd.f32 %v69, %v112
  %114 = vmatmul.f32.gmra.mxu0 %v28
  %v115 = vpop.f32.mrf.mxu0
  %v116 = vadd.f32 %v69, %v115
  %117 = vmatmul.f32.gmra.mxu0 %v29
  %v118 = vpop.f32.mrf.mxu0
  %v119 = vadd.f32 %v69, %v118
  %120 = vmatmul.f32.gmra.mxu0 %v30
  %v121 = vpop.f32.mrf.mxu0
  %v122 = vadd.f32 %v69, %v121
  %123 = vmatmul.f32.gmra.mxu0 %v31
  %v124 = vpop.f32.mrf.mxu0
  %v125 = vadd.f32 %v69, %v124
  %126 = vmatmul.f32.gmra.mxu0 %v32
  %v127 = vpop.f32.mrf.mxu0
  %v128 = vadd.f32 %v69, %v127
  %129 = vmatmul.f32.gmra.mxu0 %v33
  %v130 = vpop.f32.mrf.mxu0
  %v131 = vadd.f32 %v69, %v130
  %132 = vmatmul.f32.gmra.mxu0 %v34
  %v133 = vpop.f32.mrf.mxu0
  %v134 = vadd.f32 %v69, %v133
  %135 = vmatmul.f32.gmra.mxu0 %v35
  %v136 = vpop.f32.mrf.mxu0
  %v137 = vadd.f32 %v69, %v136
  %138 = vmatmul.f32.gmra.mxu0 %v36
  %v139 = vpop.f32.mrf.mxu0
  %v140 = vadd.f32 %v69, %v139
  %141 = vmatmul.f32.gmra.mxu0 %v37
  %v142 = vpop.f32.mrf.mxu0
  %v143 = vadd.f32 %v69, %v142
  %144 = vmatmul.f32.gmra.mxu0 %v38
  %v145 = vpop.f32.mrf.mxu0
  %v146 = vadd.f32 %v69, %v145
  %147 = vmatmul.f32.gmra.mxu0 %v39
  %v148 = vpop.f32.mrf.mxu0
  %v149 = vadd.f32 %v69, %v148
  %150 = vmatmul.f32.gmra.mxu0 %v40
  %v151 = vpop.f32.mrf.mxu0
  %v152 = vadd.f32 %v69, %v151
  %153 = vmatmul.f32.gmra.mxu0 %v41
  %v154 = vpop.f32.mrf.mxu0
  %v155 = vadd.f32 %v69, %v154
  %156 = vmatmul.f32.gmra.mxu0 %v42
  %v157 = vpop.f32.mrf.mxu0
  %v158 = vadd.f32 %v69, %v157
  %159 = vmatmul.f32.gmra.mxu0 %v43
  %v160 = vpop.f32.mrf.mxu0
  %v161 = vadd.f32 %v69, %v160
  %162 = vmatmul.f32.gmra.mxu0 %v44
  %v163 = vpop.f32.mrf.mxu0
  %v164 = vadd.f32 %v69, %v163
  %165 = vmatmul.f32.gmra.mxu0 %v45
  %v166 = vpop.f32.mrf.mxu0
  %v167 = vadd.f32 %v69, %v166
  %168 = vmatmul.f32.gmra.mxu0 %v46
  %v169 = vpop.f32.mrf.mxu0
  %v170 = vadd.f32 %v69, %v169
  %171 = vmatmul.f32.gmra.mxu0 %v47
  %v172 = vpop.f32.mrf.mxu0
  %v173 = vadd.f32 %v69, %v172
  %174 = vmatmul.f32.gmra.mxu0 %v48
  %v175 = vpop.f32.mrf.mxu0
  %v176 = vadd.f32 %v69, %v175
  %177 = vmatmul.f32.gmra.mxu0 %v49
  %v178 = vpop.f32.mrf.mxu0
  %v179 = vadd.f32 %v69, %v178
  %180 = vmatmul.f32.gmra.mxu0 %v50
  %v181 = vpop.f32.mrf.mxu0
  %v182 = vadd.f32 %v69, %v181
  %183 = vdwg.mxu0
  %184 = vst [vmem:[%s4] sm:$0xff] %v89
  %185 = vst [vmem:[%s4 + $0x8] sm:$0xff] %v92
  %186 = vst [vmem:[%s4 + $0x10] sm:$0xff] %v95
  %187 = vst [vmem:[%s4 + $0x18] sm:$0xff] %v98
  %188 = vst [vmem:[%s4 + $0x20] sm:$0xff] %v101
  %189 = vst [vmem:[%s4 + $0x28] sm:$0xff] %v104
  %190 = vst [vmem:[%s4 + $0x30] sm:$0xff] %v107
  %191 = vst [vmem:[%s4 + $0x38] sm:$0xff] %v110
  %192 = vst [vmem:[%s4 + $0x40] sm:$0xff] %v113
  %193 = vst [vmem:[%s4 + $0x48] sm:$0xff] %v116
  %194 = vst [vmem:[%s4 + $0x50] sm:$0xff] %v119
  %195 = vst [vmem:[%s4 + $0x58] sm:$0xff] %v122
  %196 = vst [vmem:[%s4 + $0x60] sm:$0xff] %v125
  %197 = vst [vmem:[%s4 + $0x68] sm:$0xff] %v128
  %198 = vst [vmem:[%s4 + $0x70] sm:$0xff] %v131
  %199 = vst [vmem:[%s4 + $0x78] sm:$0xff] %v134
  %200 = vst [vmem:[%s4 + $0x80] sm:$0xff] %v137
  %201 = vst [vmem:[%s4 + $0x88] sm:$0xff] %v140
  %202 = vst [vmem:[%s4 + $0x90] sm:$0xff] %v143
  %203 = vst [vmem:[%s4 + $0x98] sm:$0xff] %v146
  %204 = vst [vmem:[%s4 + $0xa0] sm:$0xff] %v149
  %205 = vst [vmem:[%s4 + $0xa8] sm:$0xff] %v152
  %206 = vst [vmem:[%s4 + $0xb0] sm:$0xff] %v155
  %207 = vst [vmem:[%s4 + $0xb8] sm:$0xff] %v158
  %208 = vst [vmem:[%s4 + $0xc0] sm:$0xff] %v161
  %209 = vst [vmem:[%s4 + $0xc8] sm:$0xff] %v164
  %210 = vst [vmem:[%s4 + $0xd0] sm:$0xff] %v167
  %211 = vst [vmem:[%s4 + $0xd8] sm:$0xff] %v170
  %212 = vst [vmem:[%s4 + $0xe0] sm:$0xff] %v173
  %213 = vst [vmem:[%s4 + $0xe8] sm:$0xff] %v176
  %214 = vst [vmem:[%s4 + $0xf0] sm:$0xff] %v179
  %215 = vst [vmem:[%s4 + $0xf8] sm:$0xff] %v182
  %v216 = vld [vmem:[%s2] sm:$0xff]
  %v217 = vld [vmem:[%s2 + $0x8] sm:$0xff]
  %v218 = vld [vmem:[%s2 + $0x10] sm:$0xff]
  %v219 = vld [vmem:[%s2 + $0x18] sm:$0xff]
  %v220 = vld [vmem:[%s2 + $0x20] sm:$0xff]
  %v221 = vld [vmem:[%s2 + $0x28] sm:$0xff]
  %v222 = vld [vmem:[%s2 + $0x30] sm:$0xff]
  %v223 = vld [vmem:[%s2 + $0x38] sm:$0xff]
  %v224 = vld [vmem:[%s2 + $0x40] sm:$0xff]
  %v225 = vld [vmem:[%s2 + $0x48] sm:$0xff]
  %v226 = vld [vmem:[%s2 + $0x50] sm:$0xff]
  %v227 = vld [vmem:[%s2 + $0x58] sm:$0xff]
  %v228 = vld [vmem:[%s2 + $0x60] sm:$0xff]
  %v229 = vld [vmem:[%s2 + $0x68] sm:$0xff]
  %v230 = vld [vmem:[%s2 + $0x70] sm:$0xff]
  %v231 = vld [vmem:[%s2 + $0x78] sm:$0xff]
  %232 = vmatpush.msra.mxu0 %v231
  %233 = vmatpush.msra.mxu0 %v230
  %234 = vmatpush.msra.mxu0 %v229
  %235 = vmatpush.msra.mxu0 %v228
  %236 = vmatpush.msra.mxu0 %v227
  %237 = vmatpush.msra.mxu0 %v226
  %238 = vmatpush.msra.mxu0 %v225
  %239 = vmatpush.msra.mxu0 %v224
  %240 = vmatpush.msra.mxu0 %v223
  %241 = vmatpush.msra.mxu0 %v222
  %242 = vmatpush.msra.mxu0 %v221
  %243 = vmatpush.msra.mxu0 %v220
  %244 = vmatpush.msra.mxu0 %v219
  %245 = vmatpush.msra.mxu0 %v218
  %246 = vmatpush.msra.mxu0 %v217
  %247 = vmatpush.msra.mxu0 %v216
  %248 = vmatmul.f32.gmra.mxu0 %v19
  %v249 = vpop.f32.mrf.mxu0
  %v250 = vadd.f32 0.0, %v249
  %251 = vmatmul.f32.gmra.mxu0 %v20
  %v252 = vpop.f32.mrf.mxu0
  %v253 = vadd.f32 0.0, %v252
  %254 = vmatmul.f32.gmra.mxu0 %v21
  %v255 = vpop.f32.mrf.mxu0
  %v256 = vadd.f32 0.0, %v255
  %257 = vmatmul.f32.gmra.mxu0 %v22
  %v258 = vpop.f32.mrf.mxu0
  %v259 = vadd.f32 0.0, %v258
  %260 = vmatmul.f32.gmra.mxu0 %v23
  %v261 = vpop.f32.mrf.mxu0
  %v262 = vadd.f32 0.0, %v261
  %263 = vmatmul.f32.gmra.mxu0 %v24
  %v264 = vpop.f32.mrf.mxu0
  %v265 = vadd.f32 0.0, %v264
  %266 = vmatmul.f32.gmra.mxu0 %v25
  %v267 = vpop.f32.mrf.mxu0
  %v268 = vadd.f32 0.0, %v267
  %269 = vmatmul.f32.gmra.mxu0 %v26
  %v270 = vpop.f32.mrf.mxu0
  %v271 = vadd.f32 0.0, %v270
  %272 = vmatmul.f32.gmra.mxu0 %v27
  %v273 = vpop.f32.mrf.mxu0
  %v274 = vadd.f32 0.0, %v273
  %275 = vmatmul.f32.gmra.mxu0 %v28
  %v276 = vpop.f32.mrf.mxu0
  %v277 = vadd.f32 0.0, %v276
  %278 = vmatmul.f32.gmra.mxu0 %v29
  %v279 = vpop.f32.mrf.mxu0
  %v280 = vadd.f32 0.0, %v279
  %281 = vmatmul.f32.gmra.mxu0 %v30
  %v282 = vpop.f32.mrf.mxu0
  %v283 = vadd.f32 0.0, %v282
  %284 = vmatmul.f32.gmra.mxu0 %v31
  %v285 = vpop.f32.mrf.mxu0
  %v286 = vadd.f32 0.0, %v285
  %287 = vmatmul.f32.gmra.mxu0 %v32
  %v288 = vpop.f32.mrf.mxu0
  %v289 = vadd.f32 0.0, %v288
  %290 = vmatmul.f32.gmra.mxu0 %v33
  %v291 = vpop.f32.mrf.mxu0
  %v292 = vadd.f32 0.0, %v291
  %293 = vmatmul.f32.gmra.mxu0 %v34
  %v294 = vpop.f32.mrf.mxu0
  %v295 = vadd.f32 0.0, %v294
  %296 = vmatmul.f32.gmra.mxu0 %v35
  %v297 = vpop.f32.mrf.mxu0
  %v298 = vadd.f32 0.0, %v297
  %299 = vmatmul.f32.gmra.mxu0 %v36
  %v300 = vpop.f32.mrf.mxu0
  %v301 = vadd.f32 0.0, %v300
  %302 = vmatmul.f32.gmra.mxu0 %v37
  %v303 = vpop.f32.mrf.mxu0
  %v304 = vadd.f32 0.0, %v303
  %305 = vmatmul.f32.gmra.mxu0 %v38
  %v306 = vpop.f32.mrf.mxu0
  %v307 = vadd.f32 0.0, %v306
  %308 = vmatmul.f32.gmra.mxu0 %v39
  %v309 = vpop.f32.mrf.mxu0
  %v310 = vadd.f32 0.0, %v309
  %311 = vmatmul.f32.gmra.mxu0 %v40
  %v312 = vpop.f32.mrf.mxu0
  %v313 = vadd.f32 0.0, %v312
  %314 = vmatmul.f32.gmra.mxu0 %v41
  %v315 = vpop.f32.mrf.mxu0
  %v316 = vadd.f32 0.0, %v315
  %317 = vmatmul.f32.gmra.mxu0 %v42
  %v318 = vpop.f32.mrf.mxu0
  %v319 = vadd.f32 0.0, %v318
  %320 = vmatmul.f32.gmra.mxu0 %v43
  %v321 = vpop.f32.mrf.mxu0
  %v322 = vadd.f32 0.0, %v321
  %323 = vmatmul.f32.gmra.mxu0 %v44
  %v324 = vpop.f32.mrf.mxu0
  %v325 = vadd.f32 0.0, %v324
  %326 = vmatmul.f32.gmra.mxu0 %v45
  %v327 = vpop.f32.mrf.mxu0
  %v328 = vadd.f32 0.0, %v327
  %329 = vmatmul.f32.gmra.mxu0 %v46
  %v330 = vpop.f32.mrf.mxu0
  %v331 = vadd.f32 0.0, %v330
  %332 = vmatmul.f32.gmra.mxu0 %v47
  %v333 = vpop.f32.mrf.mxu0
  %v334 = vadd.f32 0.0, %v333
  %335 = vmatmul.f32.gmra.mxu0 %v48
  %v336 = vpop.f32.mrf.mxu0
  %v337 = vadd.f32 0.0, %v336
  %338 = vmatmul.f32.gmra.mxu0 %v49
  %v339 = vpop.f32.mrf.mxu0
  %v340 = vadd.f32 0.0, %v339
  %341 = vmatmul.f32.gmra.mxu0 %v50
  %v342 = vpop.f32.mrf.mxu0
  %v343 = vadd.f32 0.0, %v342
  %344 = vdwg.mxu0
  %v345 = vpack.c.bf16 %v250, %v250
  %v346 = vpack.c.bf16 %v253, %v253
  %v347 = vpack.c.bf16 %v256, %v256
  %v348 = vpack.c.bf16 %v259, %v259
  %v349 = vpack.c.bf16 %v262, %v262
  %v350 = vpack.c.bf16 %v265, %v265
  %v351 = vpack.c.bf16 %v268, %v268
  %v352 = vpack.c.bf16 %v271, %v271
  %v353 = vpack.c.bf16 %v274, %v274
  %v354 = vpack.c.bf16 %v277, %v277
  %v355 = vpack.c.bf16 %v280, %v280
  %v356 = vpack.c.bf16 %v283, %v283
  %v357 = vpack.c.bf16 %v286, %v286
  %v358 = vpack.c.bf16 %v289, %v289
  %v359 = vpack.c.bf16 %v292, %v292
  %v360 = vpack.c.bf16 %v295, %v295
  %v361 = vpack.c.bf16 %v298, %v298
  %v362 = vpack.c.bf16 %v301, %v301
  %v363 = vpack.c.bf16 %v304, %v304
  %v364 = vpack.c.bf16 %v307, %v307
  %v365 = vpack.c.bf16 %v310, %v310
  %v366 = vpack.c.bf16 %v313, %v313
  %v367 = vpack.c.bf16 %v316, %v316
  %v368 = vpack.c.bf16 %v319, %v319
  %v369 = vpack.c.bf16 %v322, %v322
  %v370 = vpack.c.bf16 %v325, %v325
  %v371 = vpack.c.bf16 %v328, %v328
  %v372 = vpack.c.bf16 %v331, %v331
  %v373 = vpack.c.bf16 %v334, %v334
  %v374 = vpack.c.bf16 %v337, %v337
  %v375 = vpack.c.bf16 %v340, %v340
  %v376 = vpack.c.bf16 %v343, %v343
  %377 = vst [vmem:[%s5] sm:$0xf] %v345
  %378 = vst [vmem:[%s5 + $0x4] sm:$0xf] %v346
  %379 = vst [vmem:[%s5 + $0x8] sm:$0xf] %v347
  %380 = vst [vmem:[%s5 + $0xc] sm:$0xf] %v348
  %381 = vst [vmem:[%s5 + $0x10] sm:$0xf] %v349
  %382 = vst [vmem:[%s5 + $0x14] sm:$0xf] %v350
  %383 = vst [vmem:[%s5 + $0x18] sm:$0xf] %v351
  %384 = vst [vmem:[%s5 + $0x1c] sm:$0xf] %v352
  %385 = vst [vmem:[%s5 + $0x20] sm:$0xf] %v353
  %386 = vst [vmem:[%s5 + $0x24] sm:$0xf] %v354
  %387 = vst [vmem:[%s5 + $0x28] sm:$0xf] %v355
  %388 = vst [vmem:[%s5 + $0x2c] sm:$0xf] %v356
  %389 = vst [vmem:[%s5 + $0x30] sm:$0xf] %v357
  %390 = vst [vmem:[%s5 + $0x34] sm:$0xf] %v358
  %391 = vst [vmem:[%s5 + $0x38] sm:$0xf] %v359
  %392 = vst [vmem:[%s5 + $0x3c] sm:$0xf] %v360
  %393 = vst [vmem:[%s5 + $0x40] sm:$0xf] %v361
  %394 = vst [vmem:[%s5 + $0x44] sm:$0xf] %v362
  %395 = vst [vmem:[%s5 + $0x48] sm:$0xf] %v363
  %396 = vst [vmem:[%s5 + $0x4c] sm:$0xf] %v364
  %397 = vst [vmem:[%s5 + $0x50] sm:$0xf] %v365
  %398 = vst [vmem:[%s5 + $0x54] sm:$0xf] %v366
  %399 = vst [vmem:[%s5 + $0x58] sm:$0xf] %v367
  %400 = vst [vmem:[%s5 + $0x5c] sm:$0xf] %v368
  %401 = vst [vmem:[%s5 + $0x60] sm:$0xf] %v369
  %402 = vst [vmem:[%s5 + $0x64] sm:$0xf] %v370
  %403 = vst [vmem:[%s5 + $0x68] sm:$0xf] %v371
  %404 = vst [vmem:[%s5 + $0x6c] sm:$0xf] %v372
  %405 = vst [vmem:[%s5 + $0x70] sm:$0xf] %v373
  %406 = vst [vmem:[%s5 + $0x74] sm:$0xf] %v374
  %407 = vst [vmem:[%s5 + $0x78] sm:$0xf] %v375
  %408 = vst [vmem:[%s5 + $0x7c] sm:$0xf] %v376
  // Predicated region
  $region18: #{sage_conv_sum.2} parent=0 // pred_check
    _
  $region19: #{sage_conv_sum.2} parent=0 // pred_check_branch
    %410 = sbr.rel (0) target = $region21
  $region20: #{sage_conv_sum.2} parent=0 // pred_region
    _
  $region21: #{sage_conv_sum.2} parent=0 // pred_fallthru
    _
  // Predicated region
  $region22: #{sage_conv_sum.2} parent=0 // pred_check
    _
  $region23: #{sage_conv_sum.2} parent=0 // pred_check_branch
    %412 = sbr.rel (0) target = $region25
  $region24: #{sage_conv_sum.2} parent=0 // pred_region
    _
  $region25: #{sage_conv_sum.2} parent=0 // pred_fallthru
    _
  // Predicated region
  $region26: #{sage_conv_sum.2} parent=0 // pred_check
    _
  $region27: #{sage_conv_sum.2} parent=0 // pred_check_branch
    %414 = sbr.rel (0) target = $region29
  $region28: #{sage_conv_sum.2} parent=0 // pred_region
    _
  $region29: #{sage_conv_sum.2} parent=0 // pred_fallthru
    _
  // Predicated region
  $region30: #{sage_conv_sum.2} parent=0 // pred_check
    _
  $region31: #{sage_conv_sum.2} parent=0 // pred_check_branch
    %416 = sbr.rel (0) target = $region33
  $region32: #{sage_conv_sum.2} parent=0 // pred_region
    _
  $region33: #{sage_conv_sum.2} parent=0 // pred_fallthru
    _

// kernel: sage_conv_sum.3
$region0: #{sage_conv_sum.3}
  #allocation0 [shape = 'u32[]', space=smem, size = 0x4, offset = 0x4, fixed_abs, tag = 'smem constant byte address 0x4 - core index']
  #allocation1 [shape = 'u32[72,128]{1,0:T(1,128)}', space=vmem, size = 0x9000, scoped, tag = 'internal scratch']
  #allocation2 [shape = 'f32[256,128]{1,0:T(8,128)}', space=vmem, size = 0x20000, scoped, tag = 'scratch operand']
  %s0 = inlined_call_operand.vmem [shape: bf16[256,256], index: 0, kind: input, shape index: {}]
  %s1 = inlined_call_operand.vmem [shape: bf16[256,128], index: 1, kind: input, shape index: {}]
  %s2 = inlined_call_operand.vmem [shape: f32[256,128], index: 2, kind: input, shape index: {}]
  %s3 = inlined_call_operand.vmem [shape: f32[256,128], index: 3, kind: output, shape index: {}]
  %s4 = sld [smem:[#allocation0]]
  $region30: #{sage_conv_sum.3} parent=0
    _
  %s6 = ssub.s32 1, %s4
  %s7 = scalar_select 0, %s6, %s4
  // Predicated region
  $region2: #{sage_conv_sum.3} parent=0 // pred_check
    _
  $region3: #{sage_conv_sum.3} parent=0 // pred_check_branch
    %9 = sbr.rel (0) target = $region5
  $region4: #{sage_conv_sum.3} parent=0 // pred_region
    _
  $region5: #{sage_conv_sum.3} parent=0 // pred_fallthru
    _
  // Predicated region
  $region6: #{sage_conv_sum.3} parent=0 // pred_check
    _
  $region7: #{sage_conv_sum.3} parent=0 // pred_check_branch
    %11 = sbr.rel (0) target = $region9
  $region8: #{sage_conv_sum.3} parent=0 // pred_region
    _
  $region9: #{sage_conv_sum.3} parent=0 // pred_fallthru
    _
  // Predicated region
  $region10: #{sage_conv_sum.3} parent=0 // pred_check
    _
  $region11: #{sage_conv_sum.3} parent=0 // pred_check_branch
    %13 = sbr.rel (0) target = $region13
  $region12: #{sage_conv_sum.3} parent=0 // pred_region
    _
  $region13: #{sage_conv_sum.3} parent=0 // pred_fallthru
    _
  %p14 = scmp.eq.s32.totalorder 0, 0
  // Predicated region
  $region14: #{sage_conv_sum.3} parent=0 // pred_check
    %p15 = pneg %p14
  $region15: #{sage_conv_sum.3} parent=0 // pred_check_branch
    %17 = sbr.rel (%p15) target = $region17
  $region16: #{sage_conv_sum.3} parent=0 // pred_region
    %18 = vst [vmem:[#allocation2] sm:$0xff] 0.0
    %19 = vst [vmem:[#allocation2 + $0x8] sm:$0xff] 0.0
    %20 = vst [vmem:[#allocation2 + $0x10] sm:$0xff] 0.0
    %21 = vst [vmem:[#allocation2 + $0x18] sm:$0xff] 0.0
    %22 = vst [vmem:[#allocation2 + $0x20] sm:$0xff] 0.0
    %23 = vst [vmem:[#allocation2 + $0x28] sm:$0xff] 0.0
    %24 = vst [vmem:[#allocation2 + $0x30] sm:$0xff] 0.0
    %25 = vst [vmem:[#allocation2 + $0x38] sm:$0xff] 0.0
    %26 = vst [vmem:[#allocation2 + $0x40] sm:$0xff] 0.0
    %27 = vst [vmem:[#allocation2 + $0x48] sm:$0xff] 0.0
    %28 = vst [vmem:[#allocation2 + $0x50] sm:$0xff] 0.0
    %29 = vst [vmem:[#allocation2 + $0x58] sm:$0xff] 0.0
    %30 = vst [vmem:[#allocation2 + $0x60] sm:$0xff] 0.0
    %31 = vst [vmem:[#allocation2 + $0x68] sm:$0xff] 0.0
    %32 = vst [vmem:[#allocation2 + $0x70] sm:$0xff] 0.0
    %33 = vst [vmem:[#allocation2 + $0x78] sm:$0xff] 0.0
    %34 = vst [vmem:[#allocation2 + $0x80] sm:$0xff] 0.0
    %35 = vst [vmem:[#allocation2 + $0x88] sm:$0xff] 0.0
    %36 = vst [vmem:[#allocation2 + $0x90] sm:$0xff] 0.0
    %37 = vst [vmem:[#allocation2 + $0x98] sm:$0xff] 0.0
    %38 = vst [vmem:[#allocation2 + $0xa0] sm:$0xff] 0.0
    %39 = vst [vmem:[#allocation2 + $0xa8] sm:$0xff] 0.0
    %40 = vst [vmem:[#allocation2 + $0xb0] sm:$0xff] 0.0
    %41 = vst [vmem:[#allocation2 + $0xb8] sm:$0xff] 0.0
    %42 = vst [vmem:[#allocation2 + $0xc0] sm:$0xff] 0.0
    %43 = vst [vmem:[#allocation2 + $0xc8] sm:$0xff] 0.0
    %44 = vst [vmem:[#allocation2 + $0xd0] sm:$0xff] 0.0
    %45 = vst [vmem:[#allocation2 + $0xd8] sm:$0xff] 0.0
    %46 = vst [vmem:[#allocation2 + $0xe0] sm:$0xff] 0.0
    %47 = vst [vmem:[#allocation2 + $0xe8] sm:$0xff] 0.0
    %48 = vst [vmem:[#allocation2 + $0xf0] sm:$0xff] 0.0
    %49 = vst [vmem:[#allocation2 + $0xf8] sm:$0xff] 0.0
  $region17: #{sage_conv_sum.3} parent=0 // pred_fallthru
    _
  %v50 = vld [vmem:[#allocation2] sm:$0xff]
  %v51 = vld [vmem:[#allocation2 + $0x8] sm:$0xff]
  %v52 = vld [vmem:[#allocation2 + $0x10] sm:$0xff]
  %v53 = vld [vmem:[#allocation2 + $0x18] sm:$0xff]
  %v54 = vld [vmem:[#allocation2 + $0x20] sm:$0xff]
  %v55 = vld [vmem:[#allocation2 + $0x28] sm:$0xff]
  %v56 = vld [vmem:[#allocation2 + $0x30] sm:$0xff]
  %v57 = vld [vmem:[#allocation2 + $0x38] sm:$0xff]
  %v58 = vld [vmem:[#allocation2 + $0x40] sm:$0xff]
  %v59 = vld [vmem:[#allocation2 + $0x48] sm:$0xff]
  %v60 = vld [vmem:[#allocation2 + $0x50] sm:$0xff]
  %v61 = vld [vmem:[#allocation2 + $0x58] sm:$0xff]
  %v62 = vld [vmem:[#allocation2 + $0x60] sm:$0xff]
  %v63 = vld [vmem:[#allocation2 + $0x68] sm:$0xff]
  %v64 = vld [vmem:[#allocation2 + $0x70] sm:$0xff]
  %v65 = vld [vmem:[#allocation2 + $0x78] sm:$0xff]
  %v66 = vld [vmem:[#allocation2 + $0x80] sm:$0xff]
  %v67 = vld [vmem:[#allocation2 + $0x88] sm:$0xff]
  %v68 = vld [vmem:[#allocation2 + $0x90] sm:$0xff]
  %v69 = vld [vmem:[#allocation2 + $0x98] sm:$0xff]
  %v70 = vld [vmem:[#allocation2 + $0xa0] sm:$0xff]
  %v71 = vld [vmem:[#allocation2 + $0xa8] sm:$0xff]
  %v72 = vld [vmem:[#allocation2 + $0xb0] sm:$0xff]
  %v73 = vld [vmem:[#allocation2 + $0xb8] sm:$0xff]
  %v74 = vld [vmem:[#allocation2 + $0xc0] sm:$0xff]
  %v75 = vld [vmem:[#allocation2 + $0xc8] sm:$0xff]
  %v76 = vld [vmem:[#allocation2 + $0xd0] sm:$0xff]
  %v77 = vld [vmem:[#allocation2 + $0xd8] sm:$0xff]
  %v78 = vld [vmem:[#allocation2 + $0xe0] sm:$0xff]
  %v79 = vld [vmem:[#allocation2 + $0xe8] sm:$0xff]
  %v80 = vld [vmem:[#allocation2 + $0xf0] sm:$0xff]
  %v81 = vld [vmem:[#allocation2 + $0xf8] sm:$0xff]
  %v82 = vld [vmem:[%s0] sm:$0xff]
  %v83 = vld [vmem:[%s0 + $0x8] sm:$0xff]
  %v84 = vld [vmem:[%s0 + $0x10] sm:$0xff]
  %v85 = vld [vmem:[%s0 + $0x18] sm:$0xff]
  %v86 = vld [vmem:[%s0 + $0x20] sm:$0xff]
  %v87 = vld [vmem:[%s0 + $0x28] sm:$0xff]
  %v88 = vld [vmem:[%s0 + $0x30] sm:$0xff]
  %v89 = vld [vmem:[%s0 + $0x38] sm:$0xff]
  %v90 = vld [vmem:[%s0 + $0x40] sm:$0xff]
  %v91 = vld [vmem:[%s0 + $0x48] sm:$0xff]
  %v92 = vld [vmem:[%s0 + $0x50] sm:$0xff]
  %v93 = vld [vmem:[%s0 + $0x58] sm:$0xff]
  %v94 = vld [vmem:[%s0 + $0x60] sm:$0xff]
  %v95 = vld [vmem:[%s0 + $0x68] sm:$0xff]
  %v96 = vld [vmem:[%s0 + $0x70] sm:$0xff]
  %v97 = vld [vmem:[%s0 + $0x78] sm:$0xff]
  %v98 = vld [vmem:[%s0 + $0x80] sm:$0xff]
  %v99 = vld [vmem:[%s0 + $0x88] sm:$0xff]
  %v100 = vld [vmem:[%s0 + $0x90] sm:$0xff]
  %v101 = vld [vmem:[%s0 + $0x98] sm:$0xff]
  %v102 = vld [vmem:[%s0 + $0xa0] sm:$0xff]
  %v103 = vld [vmem:[%s0 + $0xa8] sm:$0xff]
  %v104 = vld [vmem:[%s0 + $0xb0] sm:$0xff]
  %v105 = vld [vmem:[%s0 + $0xb8] sm:$0xff]
  %v106 = vld [vmem:[%s0 + $0xc0] sm:$0xff]
  %v107 = vld [vmem:[%s0 + $0xc8] sm:$0xff]
  %v108 = vld [vmem:[%s0 + $0xd0] sm:$0xff]
  %v109 = vld [vmem:[%s0 + $0xd8] sm:$0xff]
  %v110 = vld [vmem:[%s0 + $0xe0] sm:$0xff]
  %v111 = vld [vmem:[%s0 + $0xe8] sm:$0xff]
  %v112 = vld [vmem:[%s0 + $0xf0] sm:$0xff]
  %v113 = vld [vmem:[%s0 + $0xf8] sm:$0xff]
  %v114 = vld [vmem:[%s1] sm:$0xf]
  %v115 = vld [vmem:[%s1 + $0x4] sm:$0xf]
  %v116 = vld [vmem:[%s1 + $0x8] sm:$0xf]
  %v117 = vld [vmem:[%s1 + $0xc] sm:$0xf]
  %v118 = vld [vmem:[%s1 + $0x10] sm:$0xf]
  %v119 = vld [vmem:[%s1 + $0x14] sm:$0xf]
  %v120 = vld [vmem:[%s1 + $0x18] sm:$0xf]
  %v121 = vld [vmem:[%s1 + $0x1c] sm:$0xf]
  %v122 = vld [vmem:[%s1 + $0x20] sm:$0xf]
  %v123 = vld [vmem:[%s1 + $0x24] sm:$0xf]
  %v124 = vld [vmem:[%s1 + $0x28] sm:$0xf]
  %v125 = vld [vmem:[%s1 + $0x2c] sm:$0xf]
  %v126 = vld [vmem:[%s1 + $0x30] sm:$0xf]
  %v127 = vld [vmem:[%s1 + $0x34] sm:$0xf]
  %v128 = vld [vmem:[%s1 + $0x38] sm:$0xf]
  %v129 = vld [vmem:[%s1 + $0x3c] sm:$0xf]
  %v130 = vld [vmem:[%s1 + $0x40] sm:$0xf]
  %v131 = vld [vmem:[%s1 + $0x44] sm:$0xf]
  %v132 = vld [vmem:[%s1 + $0x48] sm:$0xf]
  %v133 = vld [vmem:[%s1 + $0x4c] sm:$0xf]
  %v134 = vld [vmem:[%s1 + $0x50] sm:$0xf]
  %v135 = vld [vmem:[%s1 + $0x54] sm:$0xf]
  %v136 = vld [vmem:[%s1 + $0x58] sm:$0xf]
  %v137 = vld [vmem:[%s1 + $0x5c] sm:$0xf]
  %v138 = vld [vmem:[%s1 + $0x60] sm:$0xf]
  %v139 = vld [vmem:[%s1 + $0x64] sm:$0xf]
  %v140 = vld [vmem:[%s1 + $0x68] sm:$0xf]
  %v141 = vld [vmem:[%s1 + $0x6c] sm:$0xf]
  %v142 = vld [vmem:[%s1 + $0x70] sm:$0xf]
  %v143 = vld [vmem:[%s1 + $0x74] sm:$0xf]
  %v144 = vld [vmem:[%s1 + $0x78] sm:$0xf]
  %v145 = vld [vmem:[%s1 + $0x7c] sm:$0xf]
  %v178 = vunpack.c.l.b16 %v82
  %v179 = vunpack.c.h.b16 %v82
  %v180 = vunpack.c.l.b16 %v83
  %v181 = vunpack.c.h.b16 %v83
  %v182 = vunpack.c.l.b16 %v84
  %v183 = vunpack.c.h.b16 %v84
  %v184 = vunpack.c.l.b16 %v85
  %v185 = vunpack.c.h.b16 %v85
  %v186 = vunpack.c.l.b16 %v86
  %v187 = vunpack.c.h.b16 %v86
  %v188 = vunpack.c.l.b16 %v87
  %v189 = vunpack.c.h.b16 %v87
  %v190 = vunpack.c.l.b16 %v88
  %v191 = vunpack.c.h.b16 %v88
  %v192 = vunpack.c.l.b16 %v89
  %v193 = vunpack.c.h.b16 %v89
  %v194 = vunpack.c.l.b16 %v90
  %v195 = vunpack.c.h.b16 %v90
  %v196 = vunpack.c.l.b16 %v91
  %v197 = vunpack.c.h.b16 %v91
  %v198 = vunpack.c.l.b16 %v92
  %v199 = vunpack.c.h.b16 %v92
  %v200 = vunpack.c.l.b16 %v93
  %v201 = vunpack.c.h.b16 %v93
  %v202 = vunpack.c.l.b16 %v94
  %v203 = vunpack.c.h.b16 %v94
  %v204 = vunpack.c.l.b16 %v95
  %v205 = vunpack.c.h.b16 %v95
  %v206 = vunpack.c.l.b16 %v96
  %v207 = vunpack.c.h.b16 %v96
  %v208 = vunpack.c.l.b16 %v97
  %v209 = vunpack.c.h.b16 %v97
  %v210 = vunpack.c.l.b16 %v98
  %v211 = vunpack.c.h.b16 %v98
  %v212 = vunpack.c.l.b16 %v99
  %v213 = vunpack.c.h.b16 %v99
  %v214 = vunpack.c.l.b16 %v100
  %v215 = vunpack.c.h.b16 %v100
  %v216 = vunpack.c.l.b16 %v101
  %v217 = vunpack.c.h.b16 %v101
  %v218 = vunpack.c.l.b16 %v102
  %v219 = vunpack.c.h.b16 %v102
  %v220 = vunpack.c.l.b16 %v103
  %v221 = vunpack.c.h.b16 %v103
  %v222 = vunpack.c.l.b16 %v104
  %v223 = vunpack.c.h.b16 %v104
  %v224 = vunpack.c.l.b16 %v105
  %v225 = vunpack.c.h.b16 %v105
  %v226 = vunpack.c.l.b16 %v106
  %v227 = vunpack.c.h.b16 %v106
  %v228 = vunpack.c.l.b16 %v107
  %v229 = vunpack.c.h.b16 %v107
  %v230 = vunpack.c.l.b16 %v108
  %v231 = vunpack.c.h.b16 %v108
  %v232 = vunpack.c.l.b16 %v109
  %v233 = vunpack.c.h.b16 %v109
  %v234 = vunpack.c.l.b16 %v110
  %v235 = vunpack.c.h.b16 %v110
  %v236 = vunpack.c.l.b16 %v111
  %v237 = vunpack.c.h.b16 %v111
  %v238 = vunpack.c.l.b16 %v112
  %v239 = vunpack.c.h.b16 %v112
  %v240 = vunpack.c.l.b16 %v113
  %v241 = vunpack.c.h.b16 %v113
  %v242 = vpack.c.b16 %v180, %v178
  %v243 = vpack.c.b16 %v181, %v179
  %v244 = vpack.c.b16 %v184, %v182
  %v245 = vpack.c.b16 %v185, %v183
  %v246 = vpack.c.b16 %v188, %v186
  %v247 = vpack.c.b16 %v189, %v187
  %v248 = vpack.c.b16 %v192, %v190
  %v249 = vpack.c.b16 %v193, %v191
  %v250 = vpack.c.b16 %v196, %v194
  %v251 = vpack.c.b16 %v197, %v195
  %v252 = vpack.c.b16 %v200, %v198
  %v253 = vpack.c.b16 %v201, %v199
  %v254 = vpack.c.b16 %v204, %v202
  %v255 = vpack.c.b16 %v205, %v203
  %v256 = vpack.c.b16 %v208, %v206
  %v257 = vpack.c.b16 %v209, %v207
  %v258 = vpack.c.b16 %v212, %v210
  %v259 = vpack.c.b16 %v213, %v211
  %v260 = vpack.c.b16 %v216, %v214
  %v261 = vpack.c.b16 %v217, %v215
  %v262 = vpack.c.b16 %v220, %v218
  %v263 = vpack.c.b16 %v221, %v219
  %v264 = vpack.c.b16 %v224, %v222
  %v265 = vpack.c.b16 %v225, %v223
  %v266 = vpack.c.b16 %v228, %v226
  %v267 = vpack.c.b16 %v229, %v227
  %v268 = vpack.c.b16 %v232, %v230
  %v269 = vpack.c.b16 %v233, %v231
  %v270 = vpack.c.b16 %v236, %v234
  %v271 = vpack.c.b16 %v237, %v235
  %v272 = vpack.c.b16 %v240, %v238
  %v273 = vpack.c.b16 %v241, %v239
  %v338 = vunpack.c.l.b16 %v114
  %v339 = vunpack.c.l.b16 %v115
  %v340 = vunpack.c.l.b16 %v116
  %v341 = vunpack.c.l.b16 %v117
  %v342 = vunpack.c.l.b16 %v118
  %v343 = vunpack.c.l.b16 %v119
  %v344 = vunpack.c.l.b16 %v120
  %v345 = vunpack.c.l.b16 %v121
  %v346 = vunpack.c.l.b16 %v122
  %v347 = vunpack.c.l.b16 %v123
  %v348 = vunpack.c.l.b16 %v124
  %v349 = vunpack.c.l.b16 %v125
  %v350 = vunpack.c.l.b16 %v126
  %v351 = vunpack.c.l.b16 %v127
  %v352 = vunpack.c.l.b16 %v128
  %v353 = vunpack.c.l.b16 %v129
  %v354 = vunpack.c.l.b16 %v130
  %v355 = vunpack.c.l.b16 %v131
  %v356 = vunpack.c.l.b16 %v132
  %v357 = vunpack.c.l.b16 %v133
  %v358 = vunpack.c.l.b16 %v134
  %v359 = vunpack.c.l.b16 %v135
  %v360 = vunpack.c.l.b16 %v136
  %v361 = vunpack.c.l.b16 %v137
  %v362 = vunpack.c.l.b16 %v138
  %v363 = vunpack.c.l.b16 %v139
  %v364 = vunpack.c.l.b16 %v140
  %v365 = vunpack.c.l.b16 %v141
  %v366 = vunpack.c.l.b16 %v142
  %v367 = vunpack.c.l.b16 %v143
  %v368 = vunpack.c.l.b16 %v144
  %v369 = vunpack.c.l.b16 %v145
  %v370 = vpack.c.b16 %v339, %v338
  %v371 = vpack.c.b16 %v341, %v340
  %v372 = vpack.c.b16 %v343, %v342
  %v373 = vpack.c.b16 %v345, %v344
  %v374 = vpack.c.b16 %v347, %v346
  %v375 = vpack.c.b16 %v349, %v348
  %v376 = vpack.c.b16 %v351, %v350
  %v377 = vpack.c.b16 %v353, %v352
  %v378 = vpack.c.b16 %v355, %v354
  %v379 = vpack.c.b16 %v357, %v356
  %v380 = vpack.c.b16 %v359, %v358
  %v381 = vpack.c.b16 %v361, %v360
  %v382 = vpack.c.b16 %v363, %v362
  %v383 = vpack.c.b16 %v365, %v364
  %v384 = vpack.c.b16 %v367, %v366
  %v385 = vpack.c.b16 %v369, %v368
  %402 = vmatpush.bf16.msra.mxu0 %v377
  %403 = vmatpush.bf16.msra.mxu0 %v376
  %404 = vmatpush.bf16.msra.mxu0 %v375
  %405 = vmatpush.bf16.msra.mxu0 %v374
  %406 = vmatpush.bf16.msra.mxu0 %v373
  %407 = vmatpush.bf16.msra.mxu0 %v372
  %408 = vmatpush.bf16.msra.mxu0 %v371
  %409 = vmatpush.bf16.msra.mxu0 %v370
  %410 = vmatmul.bf16.gmra.mxu0 %v242
  %v411 = vpop.f32.mrf.mxu0
  %v412 = vadd.f32 0.0, %v411
  %v413 = vpop.f32.mrf.mxu0
  %v414 = vadd.f32 0.0, %v413
  %415 = vmatmul.bf16.gmra.mxu0 %v244
  %v416 = vpop.f32.mrf.mxu0
  %v417 = vadd.f32 0.0, %v416
  %v418 = vpop.f32.mrf.mxu0
  %v419 = vadd.f32 0.0, %v418
  %420 = vmatmul.bf16.gmra.mxu0 %v246
  %v421 = vpop.f32.mrf.mxu0
  %v422 = vadd.f32 0.0, %v421
  %v423 = vpop.f32.mrf.mxu0
  %v424 = vadd.f32 0.0, %v423
  %425 = vmatmul.bf16.gmra.mxu0 %v248
  %v426 = vpop.f32.mrf.mxu0
  %v427 = vadd.f32 0.0, %v426
  %v428 = vpop.f32.mrf.mxu0
  %v429 = vadd.f32 0.0, %v428
  %430 = vmatmul.bf16.gmra.mxu0 %v250
  %v431 = vpop.f32.mrf.mxu0
  %v432 = vadd.f32 0.0, %v431
  %v433 = vpop.f32.mrf.mxu0
  %v434 = vadd.f32 0.0, %v433
  %435 = vmatmul.bf16.gmra.mxu0 %v252
  %v436 = vpop.f32.mrf.mxu0
  %v437 = vadd.f32 0.0, %v436
  %v438 = vpop.f32.mrf.mxu0
  %v439 = vadd.f32 0.0, %v438
  %440 = vmatmul.bf16.gmra.mxu0 %v254
  %v441 = vpop.f32.mrf.mxu0
  %v442 = vadd.f32 0.0, %v441
  %v443 = vpop.f32.mrf.mxu0
  %v444 = vadd.f32 0.0, %v443
  %445 = vmatmul.bf16.gmra.mxu0 %v256
  %v446 = vpop.f32.mrf.mxu0
  %v447 = vadd.f32 0.0, %v446
  %v448 = vpop.f32.mrf.mxu0
  %v449 = vadd.f32 0.0, %v448
  %450 = vmatmul.bf16.gmra.mxu0 %v258
  %v451 = vpop.f32.mrf.mxu0
  %v452 = vadd.f32 0.0, %v451
  %v453 = vpop.f32.mrf.mxu0
  %v454 = vadd.f32 0.0, %v453
  %455 = vmatmul.bf16.gmra.mxu0 %v260
  %v456 = vpop.f32.mrf.mxu0
  %v457 = vadd.f32 0.0, %v456
  %v458 = vpop.f32.mrf.mxu0
  %v459 = vadd.f32 0.0, %v458
  %460 = vmatmul.bf16.gmra.mxu0 %v262
  %v461 = vpop.f32.mrf.mxu0
  %v462 = vadd.f32 0.0, %v461
  %v463 = vpop.f32.mrf.mxu0
  %v464 = vadd.f32 0.0, %v463
  %465 = vmatmul.bf16.gmra.mxu0 %v264
  %v466 = vpop.f32.mrf.mxu0
  %v467 = vadd.f32 0.0, %v466
  %v468 = vpop.f32.mrf.mxu0
  %v469 = vadd.f32 0.0, %v468
  %470 = vmatmul.bf16.gmra.mxu0 %v266
  %v471 = vpop.f32.mrf.mxu0
  %v472 = vadd.f32 0.0, %v471
  %v473 = vpop.f32.mrf.mxu0
  %v474 = vadd.f32 0.0, %v473
  %475 = vmatmul.bf16.gmra.mxu0 %v268
  %v476 = vpop.f32.mrf.mxu0
  %v477 = vadd.f32 0.0, %v476
  %v478 = vpop.f32.mrf.mxu0
  %v479 = vadd.f32 0.0, %v478
  %480 = vmatmul.bf16.gmra.mxu0 %v270
  %v481 = vpop.f32.mrf.mxu0
  %v482 = vadd.f32 0.0, %v481
  %v483 = vpop.f32.mrf.mxu0
  %v484 = vadd.f32 0.0, %v483
  %485 = vmatmul.bf16.gmra.mxu0 %v272
  %v486 = vpop.f32.mrf.mxu0
  %v487 = vadd.f32 0.0, %v486
  %v488 = vpop.f32.mrf.mxu0
  %v489 = vadd.f32 0.0, %v488
  %490 = vdwg.mxu0
  %491 = vmatpush.bf16.msra.mxu0 %v385
  %492 = vmatpush.bf16.msra.mxu0 %v384
  %493 = vmatpush.bf16.msra.mxu0 %v383
  %494 = vmatpush.bf16.msra.mxu0 %v382
  %495 = vmatpush.bf16.msra.mxu0 %v381
  %496 = vmatpush.bf16.msra.mxu0 %v380
  %497 = vmatpush.bf16.msra.mxu0 %v379
  %498 = vmatpush.bf16.msra.mxu0 %v378
  %499 = vmatmul.bf16.gmra.mxu0 %v243
  %v500 = vpop.f32.mrf.mxu0
  %v501 = vadd.f32 %v412, %v500
  %v502 = vpop.f32.mrf.mxu0
  %v503 = vadd.f32 %v414, %v502
  %504 = vmatmul.bf16.gmra.mxu0 %v245
  %v505 = vpop.f32.mrf.mxu0
  %v506 = vadd.f32 %v417, %v505
  %v507 = vpop.f32.mrf.mxu0
  %v508 = vadd.f32 %v419, %v507
  %509 = vmatmul.bf16.gmra.mxu0 %v247
  %v510 = vpop.f32.mrf.mxu0
  %v511 = vadd.f32 %v422, %v510
  %v512 = vpop.f32.mrf.mxu0
  %v513 = vadd.f32 %v424, %v512
  %514 = vmatmul.bf16.gmra.mxu0 %v249
  %v515 = vpop.f32.mrf.mxu0
  %v516 = vadd.f32 %v427, %v515
  %v517 = vpop.f32.mrf.mxu0
  %v518 = vadd.f32 %v429, %v517
  %519 = vmatmul.bf16.gmra.mxu0 %v251
  %v520 = vpop.f32.mrf.mxu0
  %v521 = vadd.f32 %v432, %v520
  %v522 = vpop.f32.mrf.mxu0
  %v523 = vadd.f32 %v434, %v522
  %524 = vmatmul.bf16.gmra.mxu0 %v253
  %v525 = vpop.f32.mrf.mxu0
  %v526 = vadd.f32 %v437, %v525
  %v527 = vpop.f32.mrf.mxu0
  %v528 = vadd.f32 %v439, %v527
  %529 = vmatmul.bf16.gmra.mxu0 %v255
  %v530 = vpop.f32.mrf.mxu0
  %v531 = vadd.f32 %v442, %v530
  %v532 = vpop.f32.mrf.mxu0
  %v533 = vadd.f32 %v444, %v532
  %534 = vmatmul.bf16.gmra.mxu0 %v257
  %v535 = vpop.f32.mrf.mxu0
  %v536 = vadd.f32 %v447, %v535
  %v537 = vpop.f32.mrf.mxu0
  %v538 = vadd.f32 %v449, %v537
  %539 = vmatmul.bf16.gmra.mxu0 %v259
  %v540 = vpop.f32.mrf.mxu0
  %v541 = vadd.f32 %v452, %v540
  %v542 = vpop.f32.mrf.mxu0
  %v543 = vadd.f32 %v454, %v542
  %544 = vmatmul.bf16.gmra.mxu0 %v261
  %v545 = vpop.f32.mrf.mxu0
  %v546 = vadd.f32 %v457, %v545
  %v547 = vpop.f32.mrf.mxu0
  %v548 = vadd.f32 %v459, %v547
  %549 = vmatmul.bf16.gmra.mxu0 %v263
  %v550 = vpop.f32.mrf.mxu0
  %v551 = vadd.f32 %v462, %v550
  %v552 = vpop.f32.mrf.mxu0
  %v553 = vadd.f32 %v464, %v552
  %554 = vmatmul.bf16.gmra.mxu0 %v265
  %v555 = vpop.f32.mrf.mxu0
  %v556 = vadd.f32 %v467, %v555
  %v557 = vpop.f32.mrf.mxu0
  %v558 = vadd.f32 %v469, %v557
  %559 = vmatmul.bf16.gmra.mxu0 %v267
  %v560 = vpop.f32.mrf.mxu0
  %v561 = vadd.f32 %v472, %v560
  %v562 = vpop.f32.mrf.mxu0
  %v563 = vadd.f32 %v474, %v562
  %564 = vmatmul.bf16.gmra.mxu0 %v269
  %v565 = vpop.f32.mrf.mxu0
  %v566 = vadd.f32 %v477, %v565
  %v567 = vpop.f32.mrf.mxu0
  %v568 = vadd.f32 %v479, %v567
  %569 = vmatmul.bf16.gmra.mxu0 %v271
  %v570 = vpop.f32.mrf.mxu0
  %v571 = vadd.f32 %v482, %v570
  %v572 = vpop.f32.mrf.mxu0
  %v573 = vadd.f32 %v484, %v572
  %574 = vmatmul.bf16.gmra.mxu0 %v273
  %v575 = vpop.f32.mrf.mxu0
  %v576 = vadd.f32 %v487, %v575
  %v577 = vpop.f32.mrf.mxu0
  %v578 = vadd.f32 %v489, %v577
  %579 = vdwg.mxu0
  %v580 = vadd.f32 %v50, %v501
  %v581 = vadd.f32 %v51, %v503
  %v582 = vadd.f32 %v52, %v506
  %v583 = vadd.f32 %v53, %v508
  %v584 = vadd.f32 %v54, %v511
  %v585 = vadd.f32 %v55, %v513
  %v586 = vadd.f32 %v56, %v516
  %v587 = vadd.f32 %v57, %v518
  %v588 = vadd.f32 %v58, %v521
  %v589 = vadd.f32 %v59, %v523
  %v590 = vadd.f32 %v60, %v526
  %v591 = vadd.f32 %v61, %v528
  %v592 = vadd.f32 %v62, %v531
  %v593 = vadd.f32 %v63, %v533
  %v594 = vadd.f32 %v64, %v536
  %v595 = vadd.f32 %v65, %v538
  %v596 = vadd.f32 %v66, %v541
  %v597 = vadd.f32 %v67, %v543
  %v598 = vadd.f32 %v68, %v546
  %v599 = vadd.f32 %v69, %v548
  %v600 = vadd.f32 %v70, %v551
  %v601 = vadd.f32 %v71, %v553
  %v602 = vadd.f32 %v72, %v556
  %v603 = vadd.f32 %v73, %v558
  %v604 = vadd.f32 %v74, %v561
  %v605 = vadd.f32 %v75, %v563
  %v606 = vadd.f32 %v76, %v566
  %v607 = vadd.f32 %v77, %v568
  %v608 = vadd.f32 %v78, %v571
  %v609 = vadd.f32 %v79, %v573
  %v610 = vadd.f32 %v80, %v576
  %v611 = vadd.f32 %v81, %v578
  %612 = vst [vmem:[#allocation2] sm:$0xff] %v580
  %613 = vst [vmem:[#allocation2 + $0x8] sm:$0xff] %v581
  %614 = vst [vmem:[#allocation2 + $0x10] sm:$0xff] %v582
  %615 = vst [vmem:[#allocation2 + $0x18] sm:$0xff] %v583
  %616 = vst [vmem:[#allocation2 + $0x20] sm:$0xff] %v584
  %617 = vst [vmem:[#allocation2 + $0x28] sm:$0xff] %v585
  %618 = vst [vmem:[#allocation2 + $0x30] sm:$0xff] %v586
  %619 = vst [vmem:[#allocation2 + $0x38] sm:$0xff] %v587
  %620 = vst [vmem:[#allocation2 + $0x40] sm:$0xff] %v588
  %621 = vst [vmem:[#allocation2 + $0x48] sm:$0xff] %v589
  %622 = vst [vmem:[#allocation2 + $0x50] sm:$0xff] %v590
  %623 = vst [vmem:[#allocation2 + $0x58] sm:$0xff] %v591
  %624 = vst [vmem:[#allocation2 + $0x60] sm:$0xff] %v592
  %625 = vst [vmem:[#allocation2 + $0x68] sm:$0xff] %v593
  %626 = vst [vmem:[#allocation2 + $0x70] sm:$0xff] %v594
  %627 = vst [vmem:[#allocation2 + $0x78] sm:$0xff] %v595
  %628 = vst [vmem:[#allocation2 + $0x80] sm:$0xff] %v596
  %629 = vst [vmem:[#allocation2 + $0x88] sm:$0xff] %v597
  %630 = vst [vmem:[#allocation2 + $0x90] sm:$0xff] %v598
  %631 = vst [vmem:[#allocation2 + $0x98] sm:$0xff] %v599
  %632 = vst [vmem:[#allocation2 + $0xa0] sm:$0xff] %v600
  %633 = vst [vmem:[#allocation2 + $0xa8] sm:$0xff] %v601
  %634 = vst [vmem:[#allocation2 + $0xb0] sm:$0xff] %v602
  %635 = vst [vmem:[#allocation2 + $0xb8] sm:$0xff] %v603
  %636 = vst [vmem:[#allocation2 + $0xc0] sm:$0xff] %v604
  %637 = vst [vmem:[#allocation2 + $0xc8] sm:$0xff] %v605
  %638 = vst [vmem:[#allocation2 + $0xd0] sm:$0xff] %v606
  %639 = vst [vmem:[#allocation2 + $0xd8] sm:$0xff] %v607
  %640 = vst [vmem:[#allocation2 + $0xe0] sm:$0xff] %v608
  %641 = vst [vmem:[#allocation2 + $0xe8] sm:$0xff] %v609
  %642 = vst [vmem:[#allocation2 + $0xf0] sm:$0xff] %v610
  %643 = vst [vmem:[#allocation2 + $0xf8] sm:$0xff] %v611
  // Predicated region
  $region18: #{sage_conv_sum.3} parent=0 // pred_check
    %p644 = pneg %p14
  $region19: #{sage_conv_sum.3} parent=0 // pred_check_branch
    %646 = sbr.rel (%p644) target = $region21
  $region20: #{sage_conv_sum.3} parent=0 // pred_region
    %v647 = vld [vmem:[#allocation2] sm:$0xff]
    %v648 = vld [vmem:[#allocation2 + $0x8] sm:$0xff]
    %v649 = vld [vmem:[#allocation2 + $0x10] sm:$0xff]
    %v650 = vld [vmem:[#allocation2 + $0x18] sm:$0xff]
    %v651 = vld [vmem:[#allocation2 + $0x20] sm:$0xff]
    %v652 = vld [vmem:[#allocation2 + $0x28] sm:$0xff]
    %v653 = vld [vmem:[#allocation2 + $0x30] sm:$0xff]
    %v654 = vld [vmem:[#allocation2 + $0x38] sm:$0xff]
    %v655 = vld [vmem:[#allocation2 + $0x40] sm:$0xff]
    %v656 = vld [vmem:[#allocation2 + $0x48] sm:$0xff]
    %v657 = vld [vmem:[#allocation2 + $0x50] sm:$0xff]
    %v658 = vld [vmem:[#allocation2 + $0x58] sm:$0xff]
    %v659 = vld [vmem:[#allocation2 + $0x60] sm:$0xff]
    %v660 = vld [vmem:[#allocation2 + $0x68] sm:$0xff]
    %v661 = vld [vmem:[#allocation2 + $0x70] sm:$0xff]
    %v662 = vld [vmem:[#allocation2 + $0x78] sm:$0xff]
    %v663 = vld [vmem:[#allocation2 + $0x80] sm:$0xff]
    %v664 = vld [vmem:[#allocation2 + $0x88] sm:$0xff]
    %v665 = vld [vmem:[#allocation2 + $0x90] sm:$0xff]
    %v666 = vld [vmem:[#allocation2 + $0x98] sm:$0xff]
    %v667 = vld [vmem:[#allocation2 + $0xa0] sm:$0xff]
    %v668 = vld [vmem:[#allocation2 + $0xa8] sm:$0xff]
    %v669 = vld [vmem:[#allocation2 + $0xb0] sm:$0xff]
    %v670 = vld [vmem:[#allocation2 + $0xb8] sm:$0xff]
    %v671 = vld [vmem:[#allocation2 + $0xc0] sm:$0xff]
    %v672 = vld [vmem:[#allocation2 + $0xc8] sm:$0xff]
    %v673 = vld [vmem:[#allocation2 + $0xd0] sm:$0xff]
    %v674 = vld [vmem:[#allocation2 + $0xd8] sm:$0xff]
    %v675 = vld [vmem:[#allocation2 + $0xe0] sm:$0xff]
    %v676 = vld [vmem:[#allocation2 + $0xe8] sm:$0xff]
    %v677 = vld [vmem:[#allocation2 + $0xf0] sm:$0xff]
    %v678 = vld [vmem:[#allocation2 + $0xf8] sm:$0xff]
    %v679 = vld [vmem:[%s2] sm:$0xff]
    %v680 = vld [vmem:[%s2 + $0x8] sm:$0xff]
    %v681 = vld [vmem:[%s2 + $0x10] sm:$0xff]
    %v682 = vld [vmem:[%s2 + $0x18] sm:$0xff]
    %v683 = vld [vmem:[%s2 + $0x20] sm:$0xff]
    %v684 = vld [vmem:[%s2 + $0x28] sm:$0xff]
    %v685 = vld [vmem:[%s2 + $0x30] sm:$0xff]
    %v686 = vld [vmem:[%s2 + $0x38] sm:$0xff]
    %v687 = vld [vmem:[%s2 + $0x40] sm:$0xff]
    %v688 = vld [vmem:[%s2 + $0x48] sm:$0xff]
    %v689 = vld [vmem:[%s2 + $0x50] sm:$0xff]
    %v690 = vld [vmem:[%s2 + $0x58] sm:$0xff]
    %v691 = vld [vmem:[%s2 + $0x60] sm:$0xff]
    %v692 = vld [vmem:[%s2 + $0x68] sm:$0xff]
    %v693 = vld [vmem:[%s2 + $0x70] sm:$0xff]
    %v694 = vld [vmem:[%s2 + $0x78] sm:$0xff]
    %v695 = vld [vmem:[%s2 + $0x80] sm:$0xff]
    %v696 = vld [vmem:[%s2 + $0x88] sm:$0xff]
    %v697 = vld [vmem:[%s2 + $0x90] sm:$0xff]
    %v698 = vld [vmem:[%s2 + $0x98] sm:$0xff]
    %v699 = vld [vmem:[%s2 + $0xa0] sm:$0xff]
    %v700 = vld [vmem:[%s2 + $0xa8] sm:$0xff]
    %v701 = vld [vmem:[%s2 + $0xb0] sm:$0xff]
    %v702 = vld [vmem:[%s2 + $0xb8] sm:$0xff]
    %v703 = vld [vmem:[%s2 + $0xc0] sm:$0xff]
    %v704 = vld [vmem:[%s2 + $0xc8] sm:$0xff]
    %v705 = vld [vmem:[%s2 + $0xd0] sm:$0xff]
    %v706 = vld [vmem:[%s2 + $0xd8] sm:$0xff]
    %v707 = vld [vmem:[%s2 + $0xe0] sm:$0xff]
    %v708 = vld [vmem:[%s2 + $0xe8] sm:$0xff]
    %v709 = vld [vmem:[%s2 + $0xf0] sm:$0xff]
    %v710 = vld [vmem:[%s2 + $0xf8] sm:$0xff]
    %v711 = vadd.f32 %v647, %v679
    %v712 = vadd.f32 %v648, %v680
    %v713 = vadd.f32 %v649, %v681
    %v714 = vadd.f32 %v650, %v682
    %v715 = vadd.f32 %v651, %v683
    %v716 = vadd.f32 %v652, %v684
    %v717 = vadd.f32 %v653, %v685
    %v718 = vadd.f32 %v654, %v686
    %v719 = vadd.f32 %v655, %v687
    %v720 = vadd.f32 %v656, %v688
    %v721 = vadd.f32 %v657, %v689
    %v722 = vadd.f32 %v658, %v690
    %v723 = vadd.f32 %v659, %v691
    %v724 = vadd.f32 %v660, %v692
    %v725 = vadd.f32 %v661, %v693
    %v726 = vadd.f32 %v662, %v694
    %v727 = vadd.f32 %v663, %v695
    %v728 = vadd.f32 %v664, %v696
    %v729 = vadd.f32 %v665, %v697
    %v730 = vadd.f32 %v666, %v698
    %v731 = vadd.f32 %v667, %v699
    %v732 = vadd.f32 %v668, %v700
    %v733 = vadd.f32 %v669, %v701
    %v734 = vadd.f32 %v670, %v702
    %v735 = vadd.f32 %v671, %v703
    %v736 = vadd.f32 %v672, %v704
    %v737 = vadd.f32 %v673, %v705
    %v738 = vadd.f32 %v674, %v706
    %v739 = vadd.f32 %v675, %v707
    %v740 = vadd.f32 %v676, %v708
    %v741 = vadd.f32 %v677, %v709
    %v742 = vadd.f32 %v678, %v710
    %743 = vst [vmem:[%s3] sm:$0xff] %v711
    %744 = vst [vmem:[%s3 + $0x8] sm:$0xff] %v712
    %745 = vst [vmem:[%s3 + $0x10] sm:$0xff] %v713
    %746 = vst [vmem:[%s3 + $0x18] sm:$0xff] %v714
    %747 = vst [vmem:[%s3 + $0x20] sm:$0xff] %v715
    %748 = vst [vmem:[%s3 + $0x28] sm:$0xff] %v716
    %749 = vst [vmem:[%s3 + $0x30] sm:$0xff] %v717
    %750 = vst [vmem:[%s3 + $0x38] sm:$0xff] %v718
    %751 = vst [vmem:[%s3 + $0x40] sm:$0xff] %v719
    %752 = vst [vmem:[%s3 + $0x48] sm:$0xff] %v720
    %753 = vst [vmem:[%s3 + $0x50] sm:$0xff] %v721
    %754 = vst [vmem:[%s3 + $0x58] sm:$0xff] %v722
    %755 = vst [vmem:[%s3 + $0x60] sm:$0xff] %v723
    %756 = vst [vmem:[%s3 + $0x68] sm:$0xff] %v724
    %757 = vst [vmem:[%s3 + $0x70] sm:$0xff] %v725
    %758 = vst [vmem:[%s3 + $0x78] sm:$0xff] %v726
    %759 = vst [vmem:[%s3 + $0x80] sm:$0xff] %v727
    %760 = vst [vmem:[%s3 + $0x88] sm:$0xff] %v728
    %761 = vst [vmem:[%s3 + $0x90] sm:$0xff] %v729
    %762 = vst [vmem:[%s3 + $0x98] sm:$0xff] %v730
    %763 = vst [vmem:[%s3 + $0xa0] sm:$0xff] %v731
    %764 = vst [vmem:[%s3 + $0xa8] sm:$0xff] %v732
    %765 = vst [vmem:[%s3 + $0xb0] sm:$0xff] %v733
    %766 = vst [vmem:[%s3 + $0xb8] sm:$0xff] %v734
    %767 = vst [vmem:[%s3 + $0xc0] sm:$0xff] %v735
    %768 = vst [vmem:[%s3 + $0xc8] sm:$0xff] %v736
    %769 = vst [vmem:[%s3 + $0xd0] sm:$0xff] %v737
    %770 = vst [vmem:[%s3 + $0xd8] sm:$0xff] %v738
    %771 = vst [vmem:[%s3 + $0xe0] sm:$0xff] %v739
    %772 = vst [vmem:[%s3 + $0xe8] sm:$0xff] %v740
    %773 = vst [vmem:[%s3 + $0xf0] sm:$0xff] %v741
    %774 = vst [vmem:[%s3 + $0xf8] sm:$0xff] %v742
  $region21: #{sage_conv_sum.3} parent=0 // pred_fallthru
    _
  // Predicated region
  $region22: #{sage_conv_sum.3} parent=0 // pred_check
    _
  $region23: #{sage_conv_sum.3} parent=0 // pred_check_branch
    %776 = sbr.rel (0) target = $region25
  $region24: #{sage_conv_sum.3} parent=0 // pred_region
    _
  $region25: #{sage_conv_sum.3} parent=0 // pred_fallthru
    _
  // Predicated region
  $region26: #{sage_conv_sum.3} parent=0 // pred_check
    _
  $region27: #{sage_conv_sum.3} parent=0 // pred_check_branch
    %778 = sbr.rel (0) target = $region29
  $region28: #{sage_conv_sum.3} parent=0 // pred_region
    _
  $region29: #{sage_conv_sum.3} parent=0 // pred_fallthru
    _

</llo_original>
